<compile_context>
chip_gen: v7x
topology: tpu7x:2x2x1
jax: 0.10.0
libtpu: 0.0.40
codegen_flags: <defaults>
</compile_context>

<pallas_src>
import jax
import jax.numpy as jnp
from jax.experimental import pallas as pl
from jax.experimental.pallas import tpu as pltpu

# ----------------------------------------------------------------------------
# Scaled-down configuration (stand-ins for resnet101 / cfg constants)
STRIDE = 16       # feature stride of RCNN_base
C_IN   = 3        # image channels
C_BASE = 128      # stand-in for dout_base_model = 1024 (kept lane-dense >=128)
C_TOP  = 128      # stand-in for 2048 (resnet layer4 channels)
POOL   = 2        # stand-in for cfg.POOLING_SIZE = 7
BBOX_PAD = 128    # pad the 4-wide bbox head so the HBM writeback is lane-dense
VMEM_LIMIT_BYTES = 32 * 1024 * 1024


# ----------------------------------------------------------------------------
# Kernel 1: base feature extractor (stride-16 patch conv as matmul + ReLU),
# tiled over the M = B*Hf*Wf axis with resident bf16 weights.
def _base_conv_kernel(x_ref, w_ref, b_ref, o_ref):
    acc = jnp.dot(x_ref[...], w_ref[...], preferred_element_type=jnp.float32)
    o_ref[...] = jnp.maximum(acc + b_ref[...], 0.0).astype(o_ref.dtype)


def base_conv(patches, w, b, *, tm=256):
    M, K = patches.shape
    N = w.shape[1]
    tm = min(tm, M)
    return pl.pallas_call(
        _base_conv_kernel,
        out_shape=jax.ShapeDtypeStruct((M, N), jnp.float32),
        grid=(pl.cdiv(M, tm),),
        in_specs=[pl.BlockSpec((tm, K), lambda i: (i, 0)),   # streamed patches
                  pl.BlockSpec((K, N), lambda i: (0, 0)),    # resident weights
                  pl.BlockSpec((1, N), lambda i: (0, 0))],   # resident bias
        out_specs=pl.BlockSpec((tm, N), lambda i: (i, 0)),
        compiler_params=pltpu.CompilerParams(
            dimension_semantics=("parallel",),
            vmem_limit_bytes=VMEM_LIMIT_BYTES),
    )(patches, w, b)


# ----------------------------------------------------------------------------
# Kernel 2: fused ROI pooling + _head_to_tail + RCNN_bbox_pred.
# One grid step = one (batch, roi-row) strip of POOL*Wf feature cells; the
# strip's row-block index comes from the scalar-prefetched proposal table.
#   h    = relu(cells @ W_top + b_top)        # 2D MXU matmul, (S, C_TOP)
#   fc7  = avg_mat @ h                        # per-ROI mean over P*P cells
#   bbox = fc7 @ W_bbox_pad + b_bbox_pad      # lane-dense (GW_PAD, 128) store
def _head_kernel(tbl_ref, x_ref, wt_ref, bt_ref, avg_ref, wb_ref, bb_ref, o_ref):
    del tbl_ref  # consumed by the index_maps
    x = x_ref[...].astype(jnp.bfloat16)                          # (S, C_BASE)
    h = jnp.dot(x, wt_ref[...], preferred_element_type=jnp.float32)
    h = jnp.maximum(h + bt_ref[...], 0.0)                        # (S, C_TOP)
    fc7 = jnp.dot(avg_ref[...], h,
                  preferred_element_type=jnp.float32)            # (GW_PAD, C_TOP)
    o_ref[...] = jnp.dot(fc7.astype(jnp.bfloat16), wb_ref[...],
                         preferred_element_type=jnp.float32) + bb_ref[...]


def roi_head(base_flat, strip_tbl, avg_mat, w_top, b_top, w_bbox_pad, b_bbox_pad,
             *, strip_rows, gw_pad):
    M, C = base_flat.shape
    n_strips = strip_tbl.shape[0]
    c_top = w_top.shape[1]
    return pl.pallas_call(
        _head_kernel,
        out_shape=jax.ShapeDtypeStruct((n_strips * gw_pad, BBOX_PAD), jnp.float32),
        grid_spec=pltpu.PrefetchScalarGridSpec(
            num_scalar_prefetch=1,
            grid=(n_strips,),
            in_specs=[
                # strip of feature cells, gathered via the prefetched table
                pl.BlockSpec((strip_rows, C), lambda g, tbl: (tbl[g], 0)),
                pl.BlockSpec((C, c_top), lambda g, tbl: (0, 0)),       # W_top
                pl.BlockSpec((1, c_top), lambda g, tbl: (0, 0)),       # b_top
                pl.BlockSpec((gw_pad, strip_rows), lambda g, tbl: (0, 0)),  # avg
                pl.BlockSpec((c_top, BBOX_PAD), lambda g, tbl: (0, 0)),     # W_bbox
                pl.BlockSpec((1, BBOX_PAD), lambda g, tbl: (0, 0)),         # b_bbox
            ],
            out_specs=pl.BlockSpec((gw_pad, BBOX_PAD), lambda g, tbl: (g, 0)),
        ),
        compiler_params=pltpu.CompilerParams(
            dimension_semantics=("parallel",),
            vmem_limit_bytes=VMEM_LIMIT_BYTES),
    )(strip_tbl, base_flat, w_top, b_top, avg_mat, w_bbox_pad, b_bbox_pad)


# ----------------------------------------------------------------------------
# Parameters (deterministic synthetic init — no checkpoint load)
def init_params(key):
    k1, k2, k3 = jax.random.split(key, 3)
    return {
        "w_base": 0.02 * jax.random.normal(
            k1, (STRIDE * STRIDE * C_IN, C_BASE), jnp.float32),
        "b_base": jnp.zeros((1, C_BASE), jnp.float32),
        "w_top": 0.02 * jax.random.normal(k2, (C_BASE, C_TOP), jnp.float32),
        "b_top": jnp.zeros((1, C_TOP), jnp.float32),
        "w_bbox": 0.02 * jax.random.normal(k3, (C_TOP, 4), jnp.float32),
        "b_bbox": jnp.zeros((1, 4), jnp.float32),
    }


# ----------------------------------------------------------------------------
# Forward: mirrors pseudo_siamese_det.forward -> (rois, bbox_pred)
def pseudo_siamese_det_forward(params, im_data, im_info, gt_boxes, num_boxes):
    del im_info, gt_boxes, num_boxes  # only used by the full RPN / training path
    B, _, H, W = im_data.shape
    Hf, Wf = H // STRIDE, W // STRIDE
    gh, gw = Hf // POOL, Wf // POOL
    R_per = gh * gw
    gw_pad = ((gw + 7) // 8) * 8
    strip_rows = POOL * Wf

    # --- RCNN_base: stride-16 patchify conv (tiled Pallas MXU matmul) ---
    # TODO(synk): the im2col transpose is done by XLA; at production scale it
    # could be folded into the BlockSpec (stride-16 row strips) to save an HBM pass.
    x = jnp.transpose(im_data, (0, 2, 3, 1))                    # NCHW -> NHWC
    patches = x.reshape(B, Hf, STRIDE, Wf, STRIDE, C_IN)
    patches = patches.transpose(0, 1, 3, 2, 4, 5).reshape(
        B * Hf * Wf, STRIDE * STRIDE * C_IN)
    base_flat = base_conv(patches.astype(jnp.bfloat16),
                          params["w_base"].astype(jnp.bfloat16),
                          params["b_base"])                     # (B*Hf*Wf, C_BASE)

    # --- RCNN_rpn (simplified): deterministic cell-aligned grid proposals ---
    # TODO(synk): anchor generation + NMS proposal layer not implemented.
    gy, gx = jnp.meshgrid(jnp.arange(gh), jnp.arange(gw), indexing="ij")
    gy = gy.reshape(-1).astype(jnp.float32)
    gx = gx.reshape(-1).astype(jnp.float32)
    x1 = gx * POOL * STRIDE
    y1 = gy * POOL * STRIDE
    x2 = x1 + POOL * STRIDE - 1.0
    y2 = y1 + POOL * STRIDE - 1.0
    boxes = jnp.stack([x1, y1, x2, y2], axis=-1)                # (R_per, 4)
    batch_col = jnp.broadcast_to(
        jnp.arange(B, dtype=jnp.float32)[:, None, None], (B, R_per, 1))
    rois = jnp.concatenate(
        [batch_col, jnp.broadcast_to(boxes[None], (B, R_per, 4))], axis=-1)

    # --- Fused RoI pooling + _head_to_tail + RCNN_bbox_pred (one Pallas pass) ---
    # The proposal table (one entry per (batch, roi-row) strip) is scalar-
    # prefetched into SMEM and drives the feature-strip BlockSpec directly.
    # TODO(synk): arbitrary (non cell-aligned) boxes would need RoIAlign
    # bilinear sampling; not implemented.
    rois_flat = rois.reshape(B * R_per, 5)
    strip_roi = rois_flat[::gw]                                  # one per (b, gy)
    strip_tbl = (strip_roi[:, 0] * gh
                 + strip_roi[:, 2] / (POOL * STRIDE)).astype(jnp.int32)

    # Averaging matrix: row j averages the POOL*POOL cells of ROI gx=j in a strip
    # (rows >= gw are zero padding so the output block stays (8k, 128)).
    cell = jnp.arange(strip_rows)
    cell_roi = (cell % Wf) // POOL
    avg_mat = jnp.where(cell_roi[None, :] == jnp.arange(gw_pad)[:, None],
                        1.0 / (POOL * POOL), 0.0).astype(jnp.float32)

    w_bbox_pad = jnp.zeros((C_TOP, BBOX_PAD), jnp.float32)
    w_bbox_pad = w_bbox_pad.at[:, :4].set(params["w_bbox"])
    b_bbox_pad = jnp.zeros((1, BBOX_PAD), jnp.float32)
    b_bbox_pad = b_bbox_pad.at[:, :4].set(params["b_bbox"])

    out = roi_head(base_flat, strip_tbl, avg_mat,
                   params["w_top"].astype(jnp.bfloat16), params["b_top"],
                   w_bbox_pad.astype(jnp.bfloat16), b_bbox_pad,
                   strip_rows=strip_rows, gw_pad=gw_pad)         # (B*gh*gw_pad, 128)

    bbox_pred = out.reshape(B, gh, gw_pad, BBOX_PAD)[:, :, :gw, :4]
    bbox_pred = bbox_pred.reshape(B, R_per, 4)
    return rois, bbox_pred


# ----------------------------------------------------------------------------
if __name__ == "__main__":
    key = jax.random.PRNGKey(0)
    pkey, dkey = jax.random.split(key)
    params = init_params(pkey)

    B, H, W = 2, 64, 64
    im_data = jax.random.normal(dkey, (B, C_IN, H, W), jnp.float32)
    im_info = jnp.tile(jnp.array([[H, W, 1.0]], jnp.float32), (B, 1))
    gt_boxes = jnp.zeros((B, 20, 5), jnp.float32)
    num_boxes = jnp.zeros((B,), jnp.int32)

    fwd = jax.jit(pseudo_siamese_det_forward)
    rois, bbox_pred = fwd(params, im_data, im_info, gt_boxes, num_boxes)
    jax.block_until_ready((rois, bbox_pred))

    R_per = rois.shape[1]
    assert rois.shape == (B, R_per, 5), rois.shape
    assert bbox_pred.shape == (B, R_per, 4), bbox_pred.shape
    assert jnp.all(jnp.isfinite(bbox_pred))
    print("KERNEL_OK")
</pallas_src>

<mosaic_0001>
module attributes {stable_mosaic.version = 11 : i64} {
  func.func @_base_conv_kernel(%arg0: i32, %arg1: memref<32x768xbf16, #tpu.memory_space<vmem>>, %arg2: memref<768x128xbf16, #tpu.memory_space<vmem>>, %arg3: memref<1x128xf32, #tpu.memory_space<vmem>>, %arg4: memref<32x128xf32, #tpu.memory_space<vmem>>) attributes {dimension_semantics = [#tpu.dimension_semantics<parallel>], iteration_bounds = array<i64: 1>, scalar_prefetch = 0 : i64, scratch_operands = 0 : i64, tpu.core_type = #tpu.core_type<tc>, window_params = [{transform_indices = @transform_0, window_bounds = array<i64: 32, 768>}, {pipeline_mode = #tpu.pipeline_mode<synchronous>, transform_indices = @transform_1, window_bounds = array<i64: 768, 128>}, {pipeline_mode = #tpu.pipeline_mode<synchronous>, transform_indices = @transform_2, window_bounds = array<i64: 1, 128>}, {transform_indices = @transform_3, window_bounds = array<i64: 32, 128>}]} {
    %c0 = arith.constant 0 : index
    %c0_0 = arith.constant 0 : index
    %0 = vector.load %arg1[%c0, %c0_0] : memref<32x768xbf16, #tpu.memory_space<vmem>>, vector<32x768xbf16>
    %c0_1 = arith.constant 0 : index
    %c0_2 = arith.constant 0 : index
    %1 = vector.load %arg2[%c0_1, %c0_2] : memref<768x128xbf16, #tpu.memory_space<vmem>>, vector<768x128xbf16>
    %cst = arith.constant dense<0.000000e+00> : vector<32x128xf32>
    %2 = tpu.matmul %0, %1, %cst {dimension_numbers = #tpu.dot_dimension_numbers<[1], [0], [0], [1], [0, 0, 1, 1], [], []>} : vector<32x768xbf16>, vector<768x128xbf16>, vector<32x128xf32> -> vector<32x128xf32>
    %c0_3 = arith.constant 0 : index
    %c0_4 = arith.constant 0 : index
    %3 = vector.load %arg3[%c0_3, %c0_4] : memref<1x128xf32, #tpu.memory_space<vmem>>, vector<1x128xf32>
    %4 = vector.broadcast %3 : vector<1x128xf32> to vector<32x128xf32>
    %5 = arith.addf %2, %4 : vector<32x128xf32>
    %cst_5 = arith.constant 0.000000e+00 : f32
    %6 = vector.broadcast %cst_5 : f32 to vector<32x128xf32>
    %7 = arith.maximumf %5, %6 : vector<32x128xf32>
    %c0_6 = arith.constant 0 : index
    %c0_7 = arith.constant 0 : index
    %8 = vector.load %arg4[%c0_6, %c0_7] : memref<32x128xf32, #tpu.memory_space<vmem>>, vector<32x128xf32>
    tpu.vector_store %arg4[%c0_6, %c0_7], %7 {strides = array<i32>} : memref<32x128xf32, #tpu.memory_space<vmem>>, vector<32x128xf32>,
    return
  }
  func.func @transform_0(%arg0: i32) -> (i32, i32) {
    %c0_i32 = arith.constant 0 : i32
    %c0_i32_0 = arith.constant 0 : i32
    return %arg0, %c0_i32 : i32, i32
  }
  func.func @transform_1(%arg0: i32) -> (i32, i32) {
    %c0_i32 = arith.constant 0 : i32
    %c0_i32_0 = arith.constant 0 : i32
    %c0_i32_1 = arith.constant 0 : i32
    return %c0_i32, %c0_i32_0 : i32, i32
  }
  func.func @transform_2(%arg0: i32) -> (i32, i32) {
    %c0_i32 = arith.constant 0 : i32
    %c0_i32_0 = arith.constant 0 : i32
    %c0_i32_1 = arith.constant 0 : i32
    return %c0_i32, %c0_i32_0 : i32, i32
  }
  func.func @transform_3(%arg0: i32) -> (i32, i32) {
    %c0_i32 = arith.constant 0 : i32
    %c0_i32_0 = arith.constant 0 : i32
    return %arg0, %c0_i32 : i32, i32
  }
}

module attributes {stable_mosaic.version = 11 : i64} {
  func.func @_head_kernel(%arg0: i32, %arg1: memref<4xi32, #tpu.memory_space<smem>>, %arg2: memref<8x128xf32, #tpu.memory_space<vmem>>, %arg3: memref<128x128xbf16, #tpu.memory_space<vmem>>, %arg4: memref<1x128xf32, #tpu.memory_space<vmem>>, %arg5: memref<8x8xf32, #tpu.memory_space<vmem>>, %arg6: memref<128x128xbf16, #tpu.memory_space<vmem>>, %arg7: memref<1x128xf32, #tpu.memory_space<vmem>>, %arg8: memref<8x128xf32, #tpu.memory_space<vmem>>) attributes {dimension_semantics = [#tpu.dimension_semantics<parallel>], iteration_bounds = array<i64: 4>, scalar_prefetch = 1 : i64, scratch_operands = 0 : i64, tpu.core_type = #tpu.core_type<tc>, window_params = [{transform_indices = @transform_0, window_bounds = array<i64: 8, 128>}, {pipeline_mode = #tpu.pipeline_mode<synchronous>, transform_indices = @transform_1, window_bounds = array<i64: 128, 128>}, {pipeline_mode = #tpu.pipeline_mode<synchronous>, transform_indices = @transform_2, window_bounds = array<i64: 1, 128>}, {pipeline_mode = #tpu.pipeline_mode<synchronous>, transform_indices = @transform_3, window_bounds = array<i64: 8, 8>}, {pipeline_mode = #tpu.pipeline_mode<synchronous>, transform_indices = @transform_4, window_bounds = array<i64: 128, 128>}, {pipeline_mode = #tpu.pipeline_mode<synchronous>, transform_indices = @transform_5, window_bounds = array<i64: 1, 128>}, {transform_indices = @transform_6, window_bounds = array<i64: 8, 128>}]} {
    %c0 = arith.constant 0 : index
    %c0_0 = arith.constant 0 : index
    %0 = vector.load %arg2[%c0, %c0_0] : memref<8x128xf32, #tpu.memory_space<vmem>>, vector<8x128xf32>
    %1 = arith.truncf %0 : vector<8x128xf32> to vector<8x128xbf16>
    %c0_1 = arith.constant 0 : index
    %c0_2 = arith.constant 0 : index
    %2 = vector.load %arg3[%c0_1, %c0_2] : memref<128x128xbf16, #tpu.memory_space<vmem>>, vector<128x128xbf16>
    %cst = arith.constant dense<0.000000e+00> : vector<8x128xf32>
    %3 = tpu.matmul %1, %2, %cst {dimension_numbers = #tpu.dot_dimension_numbers<[1], [0], [0], [1], [0, 0, 1, 1], [], []>} : vector<8x128xbf16>, vector<128x128xbf16>, vector<8x128xf32> -> vector<8x128xf32>
    %c0_3 = arith.constant 0 : index
    %c0_4 = arith.constant 0 : index
    %4 = vector.load %arg4[%c0_3, %c0_4] : memref<1x128xf32, #tpu.memory_space<vmem>>, vector<1x128xf32>
    %5 = vector.broadcast %4 : vector<1x128xf32> to vector<8x128xf32>
    %6 = arith.addf %3, %5 : vector<8x128xf32>
    %cst_5 = arith.constant 0.000000e+00 : f32
    %7 = vector.broadcast %cst_5 : f32 to vector<8x128xf32>
    %8 = arith.maximumf %6, %7 : vector<8x128xf32>
    %c0_6 = arith.constant 0 : index
    %c0_7 = arith.constant 0 : index
    %9 = vector.load %arg5[%c0_6, %c0_7] : memref<8x8xf32, #tpu.memory_space<vmem>>, vector<8x8xf32>
    %cst_8 = arith.constant dense<0.000000e+00> : vector<8x128xf32>
    %10 = tpu.matmul %9, %8, %cst_8 {dimension_numbers = #tpu.dot_dimension_numbers<[1], [0], [0], [1], [0, 0, 1, 1], [], []>} : vector<8x8xf32>, vector<8x128xf32>, vector<8x128xf32> -> vector<8x128xf32>
    %11 = arith.truncf %10 : vector<8x128xf32> to vector<8x128xbf16>
    %c0_9 = arith.constant 0 : index
    %c0_10 = arith.constant 0 : index
    %12 = vector.load %arg6[%c0_9, %c0_10] : memref<128x128xbf16, #tpu.memory_space<vmem>>, vector<128x128xbf16>
    %cst_11 = arith.constant dense<0.000000e+00> : vector<8x128xf32>
    %13 = tpu.matmul %11, %12, %cst_11 {dimension_numbers = #tpu.dot_dimension_numbers<[1], [0], [0], [1], [0, 0, 1, 1], [], []>} : vector<8x128xbf16>, vector<128x128xbf16>, vector<8x128xf32> -> vector<8x128xf32>
    %c0_12 = arith.constant 0 : index
    %c0_13 = arith.constant 0 : index
    %14 = vector.load %arg7[%c0_12, %c0_13] : memref<1x128xf32, #tpu.memory_space<vmem>>, vector<1x128xf32>
    %15 = vector.broadcast %14 : vector<1x128xf32> to vector<8x128xf32>
    %16 = arith.addf %13, %15 : vector<8x128xf32>
    %c0_14 = arith.constant 0 : index
    %c0_15 = arith.constant 0 : index
    %17 = vector.load %arg8[%c0_14, %c0_15] : memref<8x128xf32, #tpu.memory_space<vmem>>, vector<8x128xf32>
    tpu.vector_store %arg8[%c0_14, %c0_15], %16 {strides = array<i32>} : memref<8x128xf32, #tpu.memory_space<vmem>>, vector<8x128xf32>,
    return
  }
  func.func @transform_0(%arg0: i32, %arg1: memref<4xi32, #tpu.memory_space<smem>>) -> (i32, i32) {
    %0 = arith.index_cast %arg0 : i32 to index
    %1 = memref.load %arg1[%0] : memref<4xi32, #tpu.memory_space<smem>>
    %c0_i32 = arith.constant 0 : i32
    %c0_i32_0 = arith.constant 0 : i32
    return %1, %c0_i32 : i32, i32
  }
  func.func @transform_1(%arg0: i32, %arg1: memref<4xi32, #tpu.memory_space<smem>>) -> (i32, i32) {
    %c0_i32 = arith.constant 0 : i32
    %c0_i32_0 = arith.constant 0 : i32
    %c0_i32_1 = arith.constant 0 : i32
    return %c0_i32, %c0_i32_0 : i32, i32
  }
  func.func @transform_2(%arg0: i32, %arg1: memref<4xi32, #tpu.memory_space<smem>>) -> (i32, i32) {
    %c0_i32 = arith.constant 0 : i32
    %c0_i32_0 = arith.constant 0 : i32
    %c0_i32_1 = arith.constant 0 : i32
    return %c0_i32, %c0_i32_0 : i32, i32
  }
  func.func @transform_3(%arg0: i32, %arg1: memref<4xi32, #tpu.memory_space<smem>>) -> (i32, i32) {
    %c0_i32 = arith.constant 0 : i32
    %c0_i32_0 = arith.constant 0 : i32
    %c0_i32_1 = arith.constant 0 : i32
    return %c0_i32, %c0_i32_0 : i32, i32
  }
  func.func @transform_4(%arg0: i32, %arg1: memref<4xi32, #tpu.memory_space<smem>>) -> (i32, i32) {
    %c0_i32 = arith.constant 0 : i32
    %c0_i32_0 = arith.constant 0 : i32
    %c0_i32_1 = arith.constant 0 : i32
    return %c0_i32, %c0_i32_0 : i32, i32
  }
  func.func @transform_5(%arg0: i32, %arg1: memref<4xi32, #tpu.memory_space<smem>>) -> (i32, i32) {
    %c0_i32 = arith.constant 0 : i32
    %c0_i32_0 = arith.constant 0 : i32
    %c0_i32_1 = arith.constant 0 : i32
    return %c0_i32, %c0_i32_0 : i32, i32
  }
  func.func @transform_6(%arg0: i32, %arg1: memref<4xi32, #tpu.memory_space<smem>>) -> (i32, i32) {
    %c0_i32 = arith.constant 0 : i32
    %c0_i32_0 = arith.constant 0 : i32
    return %arg0, %c0_i32 : i32, i32
  }
}

</mosaic_0001>

<llo_original>
// kernel: pseudo_siamese_det_forward.2
$region0: #{pseudo_siamese_det_forward.2}
  #allocation0 [shape = 'u32[]', space=smem, size = 0x4, offset = 0x4, fixed_abs, tag = 'smem constant byte address 0x4 - core index']
  #allocation1 [shape = 'u32[144,128]{1,0:T(1,128)}', space=vmem, size = 0x12000, scoped, tag = 'internal scratch']
  %s0 = inlined_call_operand.vmem [shape: bf16[32,768], index: 0, kind: input, shape index: {}]
  %s1 = inlined_call_operand.vmem [shape: bf16[768,128], index: 1, kind: input, shape index: {}]
  %s2 = inlined_call_operand.vmem [shape: f32[1,128], index: 2, kind: input, shape index: {}]
  %s3 = inlined_call_operand.vmem [shape: f32[32,128], index: 3, kind: output, shape index: {}]
  %s4 = sld [smem:[#allocation0]]
  $region22: #{pseudo_siamese_det_forward.2} parent=0
    _
  %s6 = ssub.s32 1, %s4
  %s7 = scalar_select 0, %s6, %s4
  // Predicated region
  $region2: #{pseudo_siamese_det_forward.2} parent=0 // pred_check
    _
  $region3: #{pseudo_siamese_det_forward.2} parent=0 // pred_check_branch
    %9 = sbr.rel (0) target = $region5
  $region4: #{pseudo_siamese_det_forward.2} parent=0 // pred_region
    _
  $region5: #{pseudo_siamese_det_forward.2} parent=0 // pred_fallthru
    _
  // Predicated region
  $region6: #{pseudo_siamese_det_forward.2} parent=0 // pred_check
    _
  $region7: #{pseudo_siamese_det_forward.2} parent=0 // pred_check_branch
    %11 = sbr.rel (0) target = $region9
  $region8: #{pseudo_siamese_det_forward.2} parent=0 // pred_region
    _
  $region9: #{pseudo_siamese_det_forward.2} parent=0 // pred_fallthru
    _
  // Predicated region
  $region10: #{pseudo_siamese_det_forward.2} parent=0 // pred_check
    _
  $region11: #{pseudo_siamese_det_forward.2} parent=0 // pred_check_branch
    %13 = sbr.rel (0) target = $region13
  $region12: #{pseudo_siamese_det_forward.2} parent=0 // pred_region
    _
  $region13: #{pseudo_siamese_det_forward.2} parent=0 // pred_fallthru
    _
  %v15 = vld [vmem:[%s0] sm:$0xff]
  %v16 = vld [vmem:[%s0 + $0x8] sm:$0xff]
  %v17 = vld [vmem:[%s0 + $0x10] sm:$0xff]
  %v18 = vld [vmem:[%s0 + $0x18] sm:$0xff]
  %v19 = vld [vmem:[%s0 + $0x20] sm:$0xff]
  %v20 = vld [vmem:[%s0 + $0x28] sm:$0xff]
  %v21 = vld [vmem:[%s0 + $0x30] sm:$0xff]
  %v22 = vld [vmem:[%s0 + $0x38] sm:$0xff]
  %v23 = vld [vmem:[%s0 + $0x40] sm:$0xff]
  %v24 = vld [vmem:[%s0 + $0x48] sm:$0xff]
  %v25 = vld [vmem:[%s0 + $0x50] sm:$0xff]
  %v26 = vld [vmem:[%s0 + $0x58] sm:$0xff]
  %v27 = vld [vmem:[%s1] sm:$0xf]
  %v28 = vld [vmem:[%s1 + $0x4] sm:$0xf]
  %v29 = vld [vmem:[%s1 + $0x8] sm:$0xf]
  %v30 = vld [vmem:[%s1 + $0xc] sm:$0xf]
  %v31 = vld [vmem:[%s1 + $0x10] sm:$0xf]
  %v32 = vld [vmem:[%s1 + $0x14] sm:$0xf]
  %v33 = vld [vmem:[%s1 + $0x18] sm:$0xf]
  %v34 = vld [vmem:[%s1 + $0x1c] sm:$0xf]
  %v35 = vld [vmem:[%s1 + $0x20] sm:$0xf]
  %v36 = vld [vmem:[%s1 + $0x24] sm:$0xf]
  %v37 = vld [vmem:[%s1 + $0x28] sm:$0xf]
  %v38 = vld [vmem:[%s1 + $0x2c] sm:$0xf]
  %v39 = vld [vmem:[%s1 + $0x30] sm:$0xf]
  %v40 = vld [vmem:[%s1 + $0x34] sm:$0xf]
  %v41 = vld [vmem:[%s1 + $0x38] sm:$0xf]
  %v42 = vld [vmem:[%s1 + $0x3c] sm:$0xf]
  %v43 = vld [vmem:[%s1 + $0x40] sm:$0xf]
  %v44 = vld [vmem:[%s1 + $0x44] sm:$0xf]
  %v45 = vld [vmem:[%s1 + $0x48] sm:$0xf]
  %v46 = vld [vmem:[%s1 + $0x4c] sm:$0xf]
  %v47 = vld [vmem:[%s1 + $0x50] sm:$0xf]
  %v48 = vld [vmem:[%s1 + $0x54] sm:$0xf]
  %v49 = vld [vmem:[%s1 + $0x58] sm:$0xf]
  %v50 = vld [vmem:[%s1 + $0x5c] sm:$0xf]
  %v51 = vld [vmem:[%s1 + $0x60] sm:$0xf]
  %v52 = vld [vmem:[%s1 + $0x64] sm:$0xf]
  %v53 = vld [vmem:[%s1 + $0x68] sm:$0xf]
  %v54 = vld [vmem:[%s1 + $0x6c] sm:$0xf]
  %v55 = vld [vmem:[%s1 + $0x70] sm:$0xf]
  %v56 = vld [vmem:[%s1 + $0x74] sm:$0xf]
  %v57 = vld [vmem:[%s1 + $0x78] sm:$0xf]
  %v58 = vld [vmem:[%s1 + $0x7c] sm:$0xf]
  %v59 = vld [vmem:[%s1 + $0x80] sm:$0xf]
  %v60 = vld [vmem:[%s1 + $0x84] sm:$0xf]
  %v61 = vld [vmem:[%s1 + $0x88] sm:$0xf]
  %v62 = vld [vmem:[%s1 + $0x8c] sm:$0xf]
  %v63 = vld [vmem:[%s1 + $0x90] sm:$0xf]
  %v64 = vld [vmem:[%s1 + $0x94] sm:$0xf]
  %v65 = vld [vmem:[%s1 + $0x98] sm:$0xf]
  %v66 = vld [vmem:[%s1 + $0x9c] sm:$0xf]
  %v67 = vld [vmem:[%s1 + $0xa0] sm:$0xf]
  %v68 = vld [vmem:[%s1 + $0xa4] sm:$0xf]
  %v69 = vld [vmem:[%s1 + $0xa8] sm:$0xf]
  %v70 = vld [vmem:[%s1 + $0xac] sm:$0xf]
  %v71 = vld [vmem:[%s1 + $0xb0] sm:$0xf]
  %v72 = vld [vmem:[%s1 + $0xb4] sm:$0xf]
  %v73 = vld [vmem:[%s1 + $0xb8] sm:$0xf]
  %v74 = vld [vmem:[%s1 + $0xbc] sm:$0xf]
  %v75 = vld [vmem:[%s1 + $0xc0] sm:$0xf]
  %v76 = vld [vmem:[%s1 + $0xc4] sm:$0xf]
  %v77 = vld [vmem:[%s1 + $0xc8] sm:$0xf]
  %v78 = vld [vmem:[%s1 + $0xcc] sm:$0xf]
  %v79 = vld [vmem:[%s1 + $0xd0] sm:$0xf]
  %v80 = vld [vmem:[%s1 + $0xd4] sm:$0xf]
  %v81 = vld [vmem:[%s1 + $0xd8] sm:$0xf]
  %v82 = vld [vmem:[%s1 + $0xdc] sm:$0xf]
  %v83 = vld [vmem:[%s1 + $0xe0] sm:$0xf]
  %v84 = vld [vmem:[%s1 + $0xe4] sm:$0xf]
  %v85 = vld [vmem:[%s1 + $0xe8] sm:$0xf]
  %v86 = vld [vmem:[%s1 + $0xec] sm:$0xf]
  %v87 = vld [vmem:[%s1 + $0xf0] sm:$0xf]
  %v88 = vld [vmem:[%s1 + $0xf4] sm:$0xf]
  %v89 = vld [vmem:[%s1 + $0xf8] sm:$0xf]
  %v90 = vld [vmem:[%s1 + $0xfc] sm:$0xf]
  %v91 = vld [vmem:[%s1 + $0x100] sm:$0xf]
  %v92 = vld [vmem:[%s1 + $0x104] sm:$0xf]
  %v93 = vld [vmem:[%s1 + $0x108] sm:$0xf]
  %v94 = vld [vmem:[%s1 + $0x10c] sm:$0xf]
  %v95 = vld [vmem:[%s1 + $0x110] sm:$0xf]
  %v96 = vld [vmem:[%s1 + $0x114] sm:$0xf]
  %v97 = vld [vmem:[%s1 + $0x118] sm:$0xf]
  %v98 = vld [vmem:[%s1 + $0x11c] sm:$0xf]
  %v99 = vld [vmem:[%s1 + $0x120] sm:$0xf]
  %v100 = vld [vmem:[%s1 + $0x124] sm:$0xf]
  %v101 = vld [vmem:[%s1 + $0x128] sm:$0xf]
  %v102 = vld [vmem:[%s1 + $0x12c] sm:$0xf]
  %v103 = vld [vmem:[%s1 + $0x130] sm:$0xf]
  %v104 = vld [vmem:[%s1 + $0x134] sm:$0xf]
  %v105 = vld [vmem:[%s1 + $0x138] sm:$0xf]
  %v106 = vld [vmem:[%s1 + $0x13c] sm:$0xf]
  %v107 = vld [vmem:[%s1 + $0x140] sm:$0xf]
  %v108 = vld [vmem:[%s1 + $0x144] sm:$0xf]
  %v109 = vld [vmem:[%s1 + $0x148] sm:$0xf]
  %v110 = vld [vmem:[%s1 + $0x14c] sm:$0xf]
  %v111 = vld [vmem:[%s1 + $0x150] sm:$0xf]
  %v112 = vld [vmem:[%s1 + $0x154] sm:$0xf]
  %v113 = vld [vmem:[%s1 + $0x158] sm:$0xf]
  %v114 = vld [vmem:[%s1 + $0x15c] sm:$0xf]
  %v115 = vld [vmem:[%s1 + $0x160] sm:$0xf]
  %v116 = vld [vmem:[%s1 + $0x164] sm:$0xf]
  %v117 = vld [vmem:[%s1 + $0x168] sm:$0xf]
  %v118 = vld [vmem:[%s1 + $0x16c] sm:$0xf]
  %v119 = vld [vmem:[%s1 + $0x170] sm:$0xf]
  %v120 = vld [vmem:[%s1 + $0x174] sm:$0xf]
  %v121 = vld [vmem:[%s1 + $0x178] sm:$0xf]
  %v122 = vld [vmem:[%s1 + $0x17c] sm:$0xf]
  %v123 = vld [vmem:[%s2] sm:$0x1]
  %v125 = vlaneseq
  %v126 = vshrl.u32 %v125, 7
  %v127 = vsub.s32 0, %v126
  %v128 = vrot.slane %v123, %v127
  %v142 = vunpack.c.l.b16 %v15
  %v143 = vunpack.c.h.b16 %v15
  %v144 = vunpack.c.l.b16 %v16
  %v145 = vunpack.c.h.b16 %v16
  %v146 = vunpack.c.l.b16 %v17
  %v147 = vunpack.c.h.b16 %v17
  %v148 = vunpack.c.l.b16 %v18
  %v149 = vunpack.c.h.b16 %v18
  %v150 = vunpack.c.l.b16 %v19
  %v151 = vunpack.c.h.b16 %v19
  %v152 = vunpack.c.l.b16 %v20
  %v153 = vunpack.c.h.b16 %v20
  %v154 = vunpack.c.l.b16 %v21
  %v155 = vunpack.c.h.b16 %v21
  %v156 = vunpack.c.l.b16 %v22
  %v157 = vunpack.c.h.b16 %v22
  %v158 = vunpack.c.l.b16 %v23
  %v159 = vunpack.c.h.b16 %v23
  %v160 = vunpack.c.l.b16 %v24
  %v161 = vunpack.c.h.b16 %v24
  %v162 = vunpack.c.l.b16 %v25
  %v163 = vunpack.c.h.b16 %v25
  %v164 = vunpack.c.l.b16 %v26
  %v165 = vunpack.c.h.b16 %v26
  %v166 = vpack.c.b16 %v148, %v142
  %v167 = vpack.c.b16 %v149, %v143
  %v168 = vpack.c.b16 %v150, %v144
  %v169 = vpack.c.b16 %v151, %v145
  %v170 = vpack.c.b16 %v152, %v146
  %v171 = vpack.c.b16 %v153, %v147
  %v172 = vpack.c.b16 %v160, %v154
  %v173 = vpack.c.b16 %v161, %v155
  %v174 = vpack.c.b16 %v162, %v156
  %v175 = vpack.c.b16 %v163, %v157
  %v176 = vpack.c.b16 %v164, %v158
  %v177 = vpack.c.b16 %v165, %v159
  %v286 = vunpack.c.l.b16 %v27
  %v287 = vunpack.c.l.b16 %v28
  %v288 = vunpack.c.l.b16 %v29
  %v289 = vunpack.c.l.b16 %v30
  %v290 = vunpack.c.l.b16 %v31
  %v291 = vunpack.c.l.b16 %v32
  %v292 = vunpack.c.l.b16 %v33
  %v293 = vunpack.c.l.b16 %v34
  %v294 = vunpack.c.l.b16 %v35
  %v295 = vunpack.c.l.b16 %v36
  %v296 = vunpack.c.l.b16 %v37
  %v297 = vunpack.c.l.b16 %v38
  %v298 = vunpack.c.l.b16 %v39
  %v299 = vunpack.c.l.b16 %v40
  %v300 = vunpack.c.l.b16 %v41
  %v301 = vunpack.c.l.b16 %v42
  %v302 = vunpack.c.l.b16 %v43
  %v303 = vunpack.c.l.b16 %v44
  %v304 = vunpack.c.l.b16 %v45
  %v305 = vunpack.c.l.b16 %v46
  %v306 = vunpack.c.l.b16 %v47
  %v307 = vunpack.c.l.b16 %v48
  %v308 = vunpack.c.l.b16 %v49
  %v309 = vunpack.c.l.b16 %v50
  %v310 = vunpack.c.l.b16 %v51
  %v311 = vunpack.c.l.b16 %v52
  %v312 = vunpack.c.l.b16 %v53
  %v313 = vunpack.c.l.b16 %v54
  %v314 = vunpack.c.l.b16 %v55
  %v315 = vunpack.c.l.b16 %v56
  %v316 = vunpack.c.l.b16 %v57
  %v317 = vunpack.c.l.b16 %v58
  %v318 = vunpack.c.l.b16 %v59
  %v319 = vunpack.c.l.b16 %v60
  %v320 = vunpack.c.l.b16 %v61
  %v321 = vunpack.c.l.b16 %v62
  %v322 = vunpack.c.l.b16 %v63
  %v323 = vunpack.c.l.b16 %v64
  %v324 = vunpack.c.l.b16 %v65
  %v325 = vunpack.c.l.b16 %v66
  %v326 = vunpack.c.l.b16 %v67
  %v327 = vunpack.c.l.b16 %v68
  %v328 = vunpack.c.l.b16 %v69
  %v329 = vunpack.c.l.b16 %v70
  %v330 = vunpack.c.l.b16 %v71
  %v331 = vunpack.c.l.b16 %v72
  %v332 = vunpack.c.l.b16 %v73
  %v333 = vunpack.c.l.b16 %v74
  %v334 = vunpack.c.l.b16 %v75
  %v335 = vunpack.c.l.b16 %v76
  %v336 = vunpack.c.l.b16 %v77
  %v337 = vunpack.c.l.b16 %v78
  %v338 = vunpack.c.l.b16 %v79
  %v339 = vunpack.c.l.b16 %v80
  %v340 = vunpack.c.l.b16 %v81
  %v341 = vunpack.c.l.b16 %v82
  %v342 = vunpack.c.l.b16 %v83
  %v343 = vunpack.c.l.b16 %v84
  %v344 = vunpack.c.l.b16 %v85
  %v345 = vunpack.c.l.b16 %v86
  %v346 = vunpack.c.l.b16 %v87
  %v347 = vunpack.c.l.b16 %v88
  %v348 = vunpack.c.l.b16 %v89
  %v349 = vunpack.c.l.b16 %v90
  %v350 = vunpack.c.l.b16 %v91
  %v351 = vunpack.c.l.b16 %v92
  %v352 = vunpack.c.l.b16 %v93
  %v353 = vunpack.c.l.b16 %v94
  %v354 = vunpack.c.l.b16 %v95
  %v355 = vunpack.c.l.b16 %v96
  %v356 = vunpack.c.l.b16 %v97
  %v357 = vunpack.c.l.b16 %v98
  %v358 = vunpack.c.l.b16 %v99
  %v359 = vunpack.c.l.b16 %v100
  %v360 = vunpack.c.l.b16 %v101
  %v361 = vunpack.c.l.b16 %v102
  %v362 = vunpack.c.l.b16 %v103
  %v363 = vunpack.c.l.b16 %v104
  %v364 = vunpack.c.l.b16 %v105
  %v365 = vunpack.c.l.b16 %v106
  %v366 = vunpack.c.l.b16 %v107
  %v367 = vunpack.c.l.b16 %v108
  %v368 = vunpack.c.l.b16 %v109
  %v369 = vunpack.c.l.b16 %v110
  %v370 = vunpack.c.l.b16 %v111
  %v371 = vunpack.c.l.b16 %v112
  %v372 = vunpack.c.l.b16 %v113
  %v373 = vunpack.c.l.b16 %v114
  %v374 = vunpack.c.l.b16 %v115
  %v375 = vunpack.c.l.b16 %v116
  %v376 = vunpack.c.l.b16 %v117
  %v377 = vunpack.c.l.b16 %v118
  %v378 = vunpack.c.l.b16 %v119
  %v379 = vunpack.c.l.b16 %v120
  %v380 = vunpack.c.l.b16 %v121
  %v381 = vunpack.c.l.b16 %v122
  %v382 = vpack.c.b16 %v287, %v286
  %v383 = vpack.c.b16 %v289, %v288
  %v384 = vpack.c.b16 %v291, %v290
  %v385 = vpack.c.b16 %v293, %v292
  %v386 = vpack.c.b16 %v295, %v294
  %v387 = vpack.c.b16 %v297, %v296
  %v388 = vpack.c.b16 %v299, %v298
  %v389 = vpack.c.b16 %v301, %v300
  %v390 = vpack.c.b16 %v303, %v302
  %v391 = vpack.c.b16 %v305, %v304
  %v392 = vpack.c.b16 %v307, %v306
  %v393 = vpack.c.b16 %v309, %v308
  %v394 = vpack.c.b16 %v311, %v310
  %v395 = vpack.c.b16 %v313, %v312
  %v396 = vpack.c.b16 %v315, %v314
  %v397 = vpack.c.b16 %v317, %v316
  %v398 = vpack.c.b16 %v319, %v318
  %v399 = vpack.c.b16 %v321, %v320
  %v400 = vpack.c.b16 %v323, %v322
  %v401 = vpack.c.b16 %v325, %v324
  %v402 = vpack.c.b16 %v327, %v326
  %v403 = vpack.c.b16 %v329, %v328
  %v404 = vpack.c.b16 %v331, %v330
  %v405 = vpack.c.b16 %v333, %v332
  %v406 = vpack.c.b16 %v335, %v334
  %v407 = vpack.c.b16 %v337, %v336
  %v408 = vpack.c.b16 %v339, %v338
  %v409 = vpack.c.b16 %v341, %v340
  %v410 = vpack.c.b16 %v343, %v342
  %v411 = vpack.c.b16 %v345, %v344
  %v412 = vpack.c.b16 %v347, %v346
  %v413 = vpack.c.b16 %v349, %v348
  %v414 = vpack.c.b16 %v351, %v350
  %v415 = vpack.c.b16 %v353, %v352
  %v416 = vpack.c.b16 %v355, %v354
  %v417 = vpack.c.b16 %v357, %v356
  %v418 = vpack.c.b16 %v359, %v358
  %v419 = vpack.c.b16 %v361, %v360
  %v420 = vpack.c.b16 %v363, %v362
  %v421 = vpack.c.b16 %v365, %v364
  %v422 = vpack.c.b16 %v367, %v366
  %v423 = vpack.c.b16 %v369, %v368
  %v424 = vpack.c.b16 %v371, %v370
  %v425 = vpack.c.b16 %v373, %v372
  %v426 = vpack.c.b16 %v375, %v374
  %v427 = vpack.c.b16 %v377, %v376
  %v428 = vpack.c.b16 %v379, %v378
  %v429 = vpack.c.b16 %v381, %v380
  %478 = vmatprep.subr.bf16.mxu0 0
  %479 = vmatpush1.bf16.msra.mxu0 %v382
  %480 = vmatprep.subr.bf16.mxu0 0
  %481 = vmatpush1.bf16.msra.mxu0 %v383
  %482 = vmatprep.subr.bf16.mxu0 0
  %483 = vmatpush1.bf16.msra.mxu0 %v384
  %484 = vmatprep.subr.bf16.mxu0 0
  %485 = vmatpush1.bf16.msra.mxu0 %v385
  %486 = vmatprep.subr.bf16.mxu0 0
  %487 = vmatpush1.bf16.msra.mxu0 %v386
  %488 = vmatprep.subr.bf16.mxu0 0
  %489 = vmatpush1.bf16.msra.mxu0 %v387
  %490 = vmatprep.subr.bf16.mxu0 0
  %491 = vmatpush1.bf16.msra.mxu0 %v388
  %492 = vmatprep.subr.bf16.mxu0 0
  %493 = vmatpush1.bf16.msra.mxu0 %v389
  %494 = vmatprep.subr.bf16.mxu0 0
  %495 = vmatpush1.bf16.msra.mxu0 %v390
  %496 = vmatprep.subr.bf16.mxu0 0
  %497 = vmatpush1.bf16.msra.mxu0 %v391
  %498 = vmatprep.subr.bf16.mxu0 0
  %499 = vmatpush1.bf16.msra.mxu0 %v392
  %500 = vmatprep.subr.bf16.mxu0 0
  %501 = vmatpush1.bf16.msra.mxu0 %v393
  %502 = vmatprep.subr.bf16.mxu0 0
  %503 = vmatpush1.bf16.msra.mxu0 %v394
  %504 = vmatprep.subr.bf16.mxu0 0
  %505 = vmatpush1.bf16.msra.mxu0 %v395
  %506 = vmatprep.subr.bf16.mxu0 0
  %507 = vmatpush1.bf16.msra.mxu0 %v396
  %508 = vmatprep.subr.bf16.mxu0 0
  %509 = vmatpush1.bf16.msra.mxu0 %v397
  %510 = vmatprep.mubr.bf16.mxu0 %v167
  %511 = vmatmul.mubr.bf16.gmra.mrb[0].mxu0 %v166
  %v512 = vpop.f32.mrb[0].mxu0
  %v513 = vadd.f32 %v128, %v512
  %v514 = vpop.f32.mrb[0].mxu0
  %v515 = vpop.f32.mrb[0].mxu0
  %v516 = vadd.f32 %v128, %v515
  %v517 = vpop.f32.mrb[0].mxu0
  %518 = vmatprep.mubr.bf16.mxu0 %v173
  %519 = vmatmul.mubr.bf16.gmra.mrb[0].mxu0 %v172
  %v520 = vpop.f32.mrb[0].mxu0
  %v521 = vadd.f32 %v128, %v520
  %v522 = vpop.f32.mrb[0].mxu0
  %v523 = vpop.f32.mrb[0].mxu0
  %v524 = vadd.f32 %v128, %v523
  %v525 = vpop.f32.mrb[0].mxu0
  %526 = vdwg.mxu0
  %527 = vmatprep.subr.bf16.mxu0 0
  %528 = vmatpush1.bf16.msra.mxu0 %v398
  %529 = vmatprep.subr.bf16.mxu0 0
  %530 = vmatpush1.bf16.msra.mxu0 %v399
  %531 = vmatprep.subr.bf16.mxu0 0
  %532 = vmatpush1.bf16.msra.mxu0 %v400
  %533 = vmatprep.subr.bf16.mxu0 0
  %534 = vmatpush1.bf16.msra.mxu0 %v401
  %535 = vmatprep.subr.bf16.mxu0 0
  %536 = vmatpush1.bf16.msra.mxu0 %v402
  %537 = vmatprep.subr.bf16.mxu0 0
  %538 = vmatpush1.bf16.msra.mxu0 %v403
  %539 = vmatprep.subr.bf16.mxu0 0
  %540 = vmatpush1.bf16.msra.mxu0 %v404
  %541 = vmatprep.subr.bf16.mxu0 0
  %542 = vmatpush1.bf16.msra.mxu0 %v405
  %543 = vmatprep.subr.bf16.mxu0 0
  %544 = vmatpush1.bf16.msra.mxu0 %v406
  %545 = vmatprep.subr.bf16.mxu0 0
  %546 = vmatpush1.bf16.msra.mxu0 %v407
  %547 = vmatprep.subr.bf16.mxu0 0
  %548 = vmatpush1.bf16.msra.mxu0 %v408
  %549 = vmatprep.subr.bf16.mxu0 0
  %550 = vmatpush1.bf16.msra.mxu0 %v409
  %551 = vmatprep.subr.bf16.mxu0 0
  %552 = vmatpush1.bf16.msra.mxu0 %v410
  %553 = vmatprep.subr.bf16.mxu0 0
  %554 = vmatpush1.bf16.msra.mxu0 %v411
  %555 = vmatprep.subr.bf16.mxu0 0
  %556 = vmatpush1.bf16.msra.mxu0 %v412
  %557 = vmatprep.subr.bf16.mxu0 0
  %558 = vmatpush1.bf16.msra.mxu0 %v413
  %559 = vmatprep.mubr.bf16.mxu0 %v169
  %560 = vmatmul.mubr.bf16.gmra.mrb[0].mxu0 %v168
  %v561 = vpop.f32.mrb[0].mxu0
  %v562 = vadd.f32 %v513, %v561
  %v563 = vpop.f32.mrb[0].mxu0
  %v564 = vpop.f32.mrb[0].mxu0
  %v565 = vadd.f32 %v516, %v564
  %v566 = vpop.f32.mrb[0].mxu0
  %567 = vmatprep.mubr.bf16.mxu0 %v175
  %568 = vmatmul.mubr.bf16.gmra.mrb[0].mxu0 %v174
  %v569 = vpop.f32.mrb[0].mxu0
  %v570 = vadd.f32 %v521, %v569
  %v571 = vpop.f32.mrb[0].mxu0
  %v572 = vpop.f32.mrb[0].mxu0
  %v573 = vadd.f32 %v524, %v572
  %v574 = vpop.f32.mrb[0].mxu0
  %575 = vdwg.mxu0
  %576 = vmatprep.subr.bf16.mxu0 0
  %577 = vmatpush1.bf16.msra.mxu0 %v414
  %578 = vmatprep.subr.bf16.mxu0 0
  %579 = vmatpush1.bf16.msra.mxu0 %v415
  %580 = vmatprep.subr.bf16.mxu0 0
  %581 = vmatpush1.bf16.msra.mxu0 %v416
  %582 = vmatprep.subr.bf16.mxu0 0
  %583 = vmatpush1.bf16.msra.mxu0 %v417
  %584 = vmatprep.subr.bf16.mxu0 0
  %585 = vmatpush1.bf16.msra.mxu0 %v418
  %586 = vmatprep.subr.bf16.mxu0 0
  %587 = vmatpush1.bf16.msra.mxu0 %v419
  %588 = vmatprep.subr.bf16.mxu0 0
  %589 = vmatpush1.bf16.msra.mxu0 %v420
  %590 = vmatprep.subr.bf16.mxu0 0
  %591 = vmatpush1.bf16.msra.mxu0 %v421
  %592 = vmatprep.subr.bf16.mxu0 0
  %593 = vmatpush1.bf16.msra.mxu0 %v422
  %594 = vmatprep.subr.bf16.mxu0 0
  %595 = vmatpush1.bf16.msra.mxu0 %v423
  %596 = vmatprep.subr.bf16.mxu0 0
  %597 = vmatpush1.bf16.msra.mxu0 %v424
  %598 = vmatprep.subr.bf16.mxu0 0
  %599 = vmatpush1.bf16.msra.mxu0 %v425
  %600 = vmatprep.subr.bf16.mxu0 0
  %601 = vmatpush1.bf16.msra.mxu0 %v426
  %602 = vmatprep.subr.bf16.mxu0 0
  %603 = vmatpush1.bf16.msra.mxu0 %v427
  %604 = vmatprep.subr.bf16.mxu0 0
  %605 = vmatpush1.bf16.msra.mxu0 %v428
  %606 = vmatprep.subr.bf16.mxu0 0
  %607 = vmatpush1.bf16.msra.mxu0 %v429
  %608 = vmatprep.mubr.bf16.mxu0 %v171
  %609 = vmatmul.mubr.bf16.gmra.mrb[0].mxu0 %v170
  %v610 = vpop.f32.mrb[0].mxu0
  %v611 = vadd.f32 %v562, %v610
  %v612 = vpop.f32.mrb[0].mxu0
  %v613 = vpop.f32.mrb[0].mxu0
  %v614 = vadd.f32 %v565, %v613
  %v615 = vpop.f32.mrb[0].mxu0
  %616 = vmatprep.mubr.bf16.mxu0 %v177
  %617 = vmatmul.mubr.bf16.gmra.mrb[0].mxu0 %v176
  %v618 = vpop.f32.mrb[0].mxu0
  %v619 = vadd.f32 %v570, %v618
  %v620 = vpop.f32.mrb[0].mxu0
  %v621 = vpop.f32.mrb[0].mxu0
  %v622 = vadd.f32 %v573, %v621
  %v623 = vpop.f32.mrb[0].mxu0
  %624 = vdwg.mxu0
  %v625 = vmax.f32 %v611, 0.0
  %v626 = vmax.f32 %v614, 0.0
  %v627 = vmax.f32 %v619, 0.0
  %v628 = vmax.f32 %v622, 0.0
  %629 = vst [vmem:[%s3] sm:$0xff] %v625
  %630 = vst [vmem:[%s3 + $0x8] sm:$0xff] %v626
  %631 = vst [vmem:[%s3 + $0x10] sm:$0xff] %v627
  %632 = vst [vmem:[%s3 + $0x18] sm:$0xff] %v628
  // Predicated region
  $region14: #{pseudo_siamese_det_forward.2} parent=0 // pred_check
    _
  $region15: #{pseudo_siamese_det_forward.2} parent=0 // pred_check_branch
    %634 = sbr.rel (0) target = $region17
  $region16: #{pseudo_siamese_det_forward.2} parent=0 // pred_region
    _
  $region17: #{pseudo_siamese_det_forward.2} parent=0 // pred_fallthru
    _
  // Predicated region
  $region18: #{pseudo_siamese_det_forward.2} parent=0 // pred_check
    _
  $region19: #{pseudo_siamese_det_forward.2} parent=0 // pred_check_branch
    %636 = sbr.rel (0) target = $region21
  $region20: #{pseudo_siamese_det_forward.2} parent=0 // pred_region
    _
  $region21: #{pseudo_siamese_det_forward.2} parent=0 // pred_fallthru
    _

// kernel: pseudo_siamese_det_forward.3
$region0: #{pseudo_siamese_det_forward.3}
  #allocation0 [shape = 'u32[]', space=smem, size = 0x4, offset = 0x4, fixed_abs, tag = 'smem constant byte address 0x4 - core index']
  #allocation1 [shape = 'u32[144,128]{1,0:T(1,128)}', space=vmem, size = 0x12000, scoped, tag = 'internal scratch']
  #allocation2 [shape = 's32[1]{0}', space=sflag, size = 0x4, scoped, tag = 'scoped memory for pseudo_siamese_det_forward.3']
  #allocation3 [shape = 'u8[512]{0}', space=smem, size = 0x200, scoped, tag = 'prefetched SMEM operand 0']
  %s0 = inlined_call_operand.vmem [shape: s32[4], index: 0, kind: input, shape index: {}]
  %s1 = inlined_call_operand.vmem [shape: f32[32,128], index: 1, kind: input, shape index: {}]
  %s2 = inlined_call_operand.vmem [shape: bf16[128,128], index: 2, kind: input, shape index: {}]
  %s3 = inlined_call_operand.vmem [shape: f32[1,128], index: 3, kind: input, shape index: {}]
  %s4 = inlined_call_operand.vmem [shape: f32[8,8], index: 4, kind: input, shape index: {}]
  %s5 = inlined_call_operand.vmem [shape: bf16[128,128], index: 5, kind: input, shape index: {}]
  %s6 = inlined_call_operand.vmem [shape: f32[1,128], index: 6, kind: input, shape index: {}]
  %s7 = inlined_call_operand.vmem [shape: f32[32,128], index: 7, kind: output, shape index: {}]
  %s8 = sld [smem:[#allocation0]]
  $region57: #{pseudo_siamese_det_forward.3} parent=0
    _
  %s10 = ssub.s32 1, %s8
  %s11 = scalar_select 0, %s10, %s8
  %s12 = sshll.u32 %s0, 4
  %s13 = int_to_ptr.vmem [resolvable:$true] %s12
  %15 = dma.vmem_to_smem %s13, 16, [#allocation3], [#allocation2]
  %16 = dma.done [#allocation2], 16
  %17 = sfence
  loop: start=0, step=1, limit=6
  $region2: #{pseudo_siamese_det_forward.3} parent=0 // loop_pre_header
    _
  $region3: #{pseudo_siamese_det_forward.3} parent=0 // loop_header
    %s19 = sphi 0, %s23
    %p20 = scmp.ge.s32.totalorder %s19, 6
    %s31 = sphi 0, %s33
    %s34 = sphi 0, %s31
    %s35 = sphi 0, %s34
    %s51 = sphi 0, %s35
    %s55 = sphi 0, %s55
    %s57 = sphi 0, %s55
    %s58 = sphi 0, %s57
    %s72 = sphi 0, %s58
    %s76 = sphi 0, %s76
    %s78 = sphi 0, %s76
    %s79 = sphi 0, %s78
    %s93 = sphi 0, %s79
    %s97 = sphi 0, %s97
    %s99 = sphi 0, %s97
    %s100 = sphi 0, %s99
    %s114 = sphi 0, %s100
    %s118 = sphi 0, %s118
    %s120 = sphi 0, %s118
    %s121 = sphi 0, %s120
    %s135 = sphi 0, %s121
    %s139 = sphi 0, %s139
    %s141 = sphi 0, %s139
    %s142 = sphi 0, %s141
    %s156 = sphi 0, %s142
    %s162 = sphi 0, %s164
    %s165 = sphi 0, %s162
    %s166 = sphi 0, %s165
    %s182 = sphi 0, %s166
  $region4: #{pseudo_siamese_det_forward.3} parent=0 // loop_header_branch
    %22 = sbr.rel (%p20) target = $region8
  $region5: #{pseudo_siamese_det_forward.3} parent=0 // loop_body
    %s24 = ssub.s32 %s19, 1
    %s25 = ssub.s32 %s19, 2
    %s26 = sadd.s32 %s19, 1
    %s27 = sld [smem:[#allocation3 + %s19]]
    %s28 = sld [smem:[#allocation3 + %s26]]
    %s29 = ssub.s32 %s27, %s28
    %p30 = scmp.eq.s32.totalorder %s29, 0
    %s32 = sadd.s32 %s31, 1
    %s33 = scalar_select %p30, %s31, %s32
    %p36 = pneg %p30
    %p37 = scmp.eq.s32.totalorder %s19, 3
    %p38 = por %p36, %p37
    %p39 = scmp.ne.s32.totalorder %s31, %s34
    %p40 = scmp.eq.s32.totalorder %s19, 0
    %p41 = por %p39, %p40
    %p42 = scmp.ne.s32.totalorder %s31, %s34
    %p43 = scmp.eq.s32.totalorder %s24, 3
    %p44 = por %p42, %p43
    %p45 = scmp.ne.s32.totalorder %s34, %s35
    %p46 = scmp.eq.s32.totalorder %s24, 0
    %p47 = por %p45, %p46
    %p48 = scmp.ne.s32.totalorder %s34, %s35
    %p49 = scmp.eq.s32.totalorder %s25, 3
    %p50 = por %p48, %p49
    %p52 = scmp.ne.s32.totalorder %s35, %s51
    %p53 = scmp.eq.s32.totalorder %s25, 0
    %p54 = por %p52, %p53
    %s56 = sadd.s32 %s55, 1
    %p59 = scmp.eq.s32.totalorder %s19, 3
    %p60 = scmp.ne.s32.totalorder %s55, %s57
    %p61 = scmp.eq.s32.totalorder %s19, 0
    %p62 = por %p60, %p61
    %p63 = scmp.ne.s32.totalorder %s55, %s57
    %p64 = scmp.eq.s32.totalorder %s24, 3
    %p65 = por %p63, %p64
    %p66 = scmp.ne.s32.totalorder %s57, %s58
    %p67 = scmp.eq.s32.totalorder %s24, 0
    %p68 = por %p66, %p67
    %p69 = scmp.ne.s32.totalorder %s57, %s58
    %p70 = scmp.eq.s32.totalorder %s25, 3
    %p71 = por %p69, %p70
    %p73 = scmp.ne.s32.totalorder %s58, %s72
    %p74 = scmp.eq.s32.totalorder %s25, 0
    %p75 = por %p73, %p74
    %s77 = sadd.s32 %s76, 1
    %p80 = scmp.eq.s32.totalorder %s19, 3
    %p81 = scmp.ne.s32.totalorder %s76, %s78
    %p82 = scmp.eq.s32.totalorder %s19, 0
    %p83 = por %p81, %p82
    %p84 = scmp.ne.s32.totalorder %s76, %s78
    %p85 = scmp.eq.s32.totalorder %s24, 3
    %p86 = por %p84, %p85
    %p87 = scmp.ne.s32.totalorder %s78, %s79
    %p88 = scmp.eq.s32.totalorder %s24, 0
    %p89 = por %p87, %p88
    %p90 = scmp.ne.s32.totalorder %s78, %s79
    %p91 = scmp.eq.s32.totalorder %s25, 3
    %p92 = por %p90, %p91
    %p94 = scmp.ne.s32.totalorder %s79, %s93
    %p95 = scmp.eq.s32.totalorder %s25, 0
    %p96 = por %p94, %p95
    %s98 = sadd.s32 %s97, 1
    %p101 = scmp.eq.s32.totalorder %s19, 3
    %p102 = scmp.ne.s32.totalorder %s97, %s99
    %p103 = scmp.eq.s32.totalorder %s19, 0
    %p104 = por %p102, %p103
    %p105 = scmp.ne.s32.totalorder %s97, %s99
    %p106 = scmp.eq.s32.totalorder %s24, 3
    %p107 = por %p105, %p106
    %p108 = scmp.ne.s32.totalorder %s99, %s100
    %p109 = scmp.eq.s32.totalorder %s24, 0
    %p110 = por %p108, %p109
    %p111 = scmp.ne.s32.totalorder %s99, %s100
    %p112 = scmp.eq.s32.totalorder %s25, 3
    %p113 = por %p111, %p112
    %p115 = scmp.ne.s32.totalorder %s100, %s114
    %p116 = scmp.eq.s32.totalorder %s25, 0
    %p117 = por %p115, %p116
    %s119 = sadd.s32 %s118, 1
    %p122 = scmp.eq.s32.totalorder %s19, 3
    %p123 = scmp.ne.s32.totalorder %s118, %s120
    %p124 = scmp.eq.s32.totalorder %s19, 0
    %p125 = por %p123, %p124
    %p126 = scmp.ne.s32.totalorder %s118, %s120
    %p127 = scmp.eq.s32.totalorder %s24, 3
    %p128 = por %p126, %p127
    %p129 = scmp.ne.s32.totalorder %s120, %s121
    %p130 = scmp.eq.s32.totalorder %s24, 0
    %p131 = por %p129, %p130
    %p132 = scmp.ne.s32.totalorder %s120, %s121
    %p133 = scmp.eq.s32.totalorder %s25, 3
    %p134 = por %p132, %p133
    %p136 = scmp.ne.s32.totalorder %s121, %s135
    %p137 = scmp.eq.s32.totalorder %s25, 0
    %p138 = por %p136, %p137
    %s140 = sadd.s32 %s139, 1
    %p143 = scmp.eq.s32.totalorder %s19, 3
    %p144 = scmp.ne.s32.totalorder %s139, %s141
    %p145 = scmp.eq.s32.totalorder %s19, 0
    %p146 = por %p144, %p145
    %p147 = scmp.ne.s32.totalorder %s139, %s141
    %p148 = scmp.eq.s32.totalorder %s24, 3
    %p149 = por %p147, %p148
    %p150 = scmp.ne.s32.totalorder %s141, %s142
    %p151 = scmp.eq.s32.totalorder %s24, 0
    %p152 = por %p150, %p151
    %p153 = scmp.ne.s32.totalorder %s141, %s142
    %p154 = scmp.eq.s32.totalorder %s25, 3
    %p155 = por %p153, %p154
    %p157 = scmp.ne.s32.totalorder %s142, %s156
    %p158 = scmp.eq.s32.totalorder %s25, 0
    %p159 = por %p157, %p158
    %s160 = ssub.s32 %s19, %s26
    %p161 = scmp.eq.s32.totalorder %s160, 0
    %s163 = sadd.s32 %s162, 1
    %s164 = scalar_select %p161, %s162, %s163
    %p167 = pneg %p161
    %p168 = scmp.eq.s32.totalorder %s19, 3
    %p169 = por %p167, %p168
    %p170 = scmp.ne.s32.totalorder %s162, %s165
    %p171 = scmp.eq.s32.totalorder %s19, 0
    %p172 = por %p170, %p171
    %p173 = scmp.ne.s32.totalorder %s162, %s165
    %p174 = scmp.eq.s32.totalorder %s24, 3
    %p175 = por %p173, %p174
    %p176 = scmp.ne.s32.totalorder %s165, %s166
    %p177 = scmp.eq.s32.totalorder %s24, 0
    %p178 = por %p176, %p177
    %p179 = scmp.ne.s32.totalorder %s165, %s166
    %p180 = scmp.eq.s32.totalorder %s25, 3
    %p181 = por %p179, %p180
    %p183 = scmp.ne.s32.totalorder %s166, %s182
    %p184 = scmp.eq.s32.totalorder %s25, 0
    %p185 = por %p183, %p184
    %p186 = scmp.le.s32.totalorder 1, %s19
    %p187 = scmp.lt.s32.totalorder %s19, 5
    %p188 = pnand %p186, %p187
    %p189 = pneg %p188
    // Predicated region
    $region9: #{pseudo_siamese_det_forward.3} parent=5 // pred_check
      _
    $region10: #{pseudo_siamese_det_forward.3} parent=5 // pred_check_branch
      %191 = sbr.rel (%p188) target = $region12
    $region11: #{pseudo_siamese_det_forward.3} parent=5 // pred_region
      %s192 = ssub.s32 %s19, 1
      // Predicated region
      $region13: #{pseudo_siamese_det_forward.3} parent=11 // pred_check
        %p193 = pneg %p68
      $region14: #{pseudo_siamese_det_forward.3} parent=11 // pred_check_branch
        %195 = sbr.rel (%p193) target = $region16
      $region15: #{pseudo_siamese_det_forward.3} parent=11 // pred_region
        _
      $region16: #{pseudo_siamese_det_forward.3} parent=11 // pred_fallthru
        _
      // Predicated region
      $region17: #{pseudo_siamese_det_forward.3} parent=11 // pred_check
        %p196 = pneg %p89
      $region18: #{pseudo_siamese_det_forward.3} parent=11 // pred_check_branch
        %198 = sbr.rel (%p196) target = $region20
      $region19: #{pseudo_siamese_det_forward.3} parent=11 // pred_region
        _
      $region20: #{pseudo_siamese_det_forward.3} parent=11 // pred_fallthru
        _
      // Predicated region
      $region21: #{pseudo_siamese_det_forward.3} parent=11 // pred_check
        %p199 = pneg %p110
      $region22: #{pseudo_siamese_det_forward.3} parent=11 // pred_check_branch
        %201 = sbr.rel (%p199) target = $region24
      $region23: #{pseudo_siamese_det_forward.3} parent=11 // pred_region
        _
      $region24: #{pseudo_siamese_det_forward.3} parent=11 // pred_fallthru
        _
      // Predicated region
      $region25: #{pseudo_siamese_det_forward.3} parent=11 // pred_check
        %p202 = pneg %p131
      $region26: #{pseudo_siamese_det_forward.3} parent=11 // pred_check_branch
        %204 = sbr.rel (%p202) target = $region28
      $region27: #{pseudo_siamese_det_forward.3} parent=11 // pred_region
        _
      $region28: #{pseudo_siamese_det_forward.3} parent=11 // pred_fallthru
        _
      // Predicated region
      $region29: #{pseudo_siamese_det_forward.3} parent=11 // pred_check
        %p205 = pneg %p152
      $region30: #{pseudo_siamese_det_forward.3} parent=11 // pred_check_branch
        %207 = sbr.rel (%p205) target = $region32
      $region31: #{pseudo_siamese_det_forward.3} parent=11 // pred_region
        _
      $region32: #{pseudo_siamese_det_forward.3} parent=11 // pred_fallthru
        _
    $region12: #{pseudo_siamese_det_forward.3} parent=5 // pred_fallthru
      _
    %p208 = scmp.lt.s32.totalorder %s19, 4
    // Predicated region
    $region33: #{pseudo_siamese_det_forward.3} parent=5 // pred_check
      %p209 = pneg %p208
    $region34: #{pseudo_siamese_det_forward.3} parent=5 // pred_check_branch
      %211 = sbr.rel (%p209) target = $region36
    $region35: #{pseudo_siamese_det_forward.3} parent=5 // pred_region
      // Predicated region
      $region37: #{pseudo_siamese_det_forward.3} parent=35 // pred_check
        %p212 = pneg %p41
      $region38: #{pseudo_siamese_det_forward.3} parent=35 // pred_check_branch
        %214 = sbr.rel (%p212) target = $region40
      $region39: #{pseudo_siamese_det_forward.3} parent=35 // pred_region
        %s215 = sld [smem:[#allocation3 + %s19]]
        %p216 = scmp.lt.s32.totalorder %s215, 3
        %s217 = scalar_select %p216, %s215, 3
        %s218 = smul.addr %s217, 8
        %s219 = scalar_lea.vmem %s1, %s218
        %s220 = sld [smem:[#allocation3 + %s19]]
      $region40: #{pseudo_siamese_det_forward.3} parent=35 // pred_fallthru
        _
    $region36: #{pseudo_siamese_det_forward.3} parent=5 // pred_fallthru
      _
    %p221 = scmp.le.s32.totalorder 1, %s19
    %p222 = scmp.lt.s32.totalorder %s19, 5
    %p223 = pnand %p221, %p222
    %p224 = pneg %p223
    // Predicated region
    $region41: #{pseudo_siamese_det_forward.3} parent=5 // pred_check
      _
    $region42: #{pseudo_siamese_det_forward.3} parent=5 // pred_check_branch
      %226 = sbr.rel (%p223) target = $region44
    $region43: #{pseudo_siamese_det_forward.3} parent=5 // pred_region
      %s227 = ssub.s32 %s19, 1
      %s228 = sld [smem:[#allocation3 + %s24]]
      %p229 = scmp.lt.s32.totalorder %s228, 3
      %s230 = scalar_select %p229, %s228, 3
      %s231 = smul.addr %s230, 8
      %s232 = scalar_lea.vmem %s1, %s231
      %p233 = pneg %p47
      %p234 = pneg %p44
      %p235 = pneg %p68
      %p236 = pneg %p65
      %p237 = pneg %p89
      %p238 = pneg %p86
      %p239 = pneg %p110
      %p240 = pneg %p107
      %p241 = pneg %p131
      %p242 = pneg %p128
      %p243 = pneg %p152
      %p244 = pneg %p149
      %p245 = pneg %p178
      %p246 = pneg %p175
      %p247 = scmp.lt.s32.totalorder %s24, 3
      %s248 = scalar_select %p247, %s24, 3
      %s249 = smul.addr %s248, 8
      %s250 = scalar_lea.vmem %s7, %s249
      %s251 = sld [smem:[#allocation3 + %s24]]
      %p252 = scmp.lt.s32.totalorder %s251, 3
      %s253 = scalar_select %p252, %s251, 3
      %s254 = smul.addr %s253, 8
      %s255 = scalar_lea.vmem %s1, %s254
      %s256 = sld [smem:[#allocation3 + %s24]]
      %p257 = scmp.lt.s32.totalorder %s24, 3
      %s258 = scalar_select %p257, %s24, 3
      %s259 = smul.addr %s258, 8
      %s260 = scalar_lea.vmem %s7, %s259
      %v262 = vld [vmem:[%s255] sm:$0xff]
      %v263 = vpack.c.bf16 %v262, %v262
      %v264 = vld [vmem:[%s2] sm:$0xf]
      %v265 = vld [vmem:[%s2 + $0x4] sm:$0xf]
      %v266 = vld [vmem:[%s2 + $0x8] sm:$0xf]
      %v267 = vld [vmem:[%s2 + $0xc] sm:$0xf]
      %v268 = vld [vmem:[%s2 + $0x10] sm:$0xf]
      %v269 = vld [vmem:[%s2 + $0x14] sm:$0xf]
      %v270 = vld [vmem:[%s2 + $0x18] sm:$0xf]
      %v271 = vld [vmem:[%s2 + $0x1c] sm:$0xf]
      %v272 = vld [vmem:[%s2 + $0x20] sm:$0xf]
      %v273 = vld [vmem:[%s2 + $0x24] sm:$0xf]
      %v274 = vld [vmem:[%s2 + $0x28] sm:$0xf]
      %v275 = vld [vmem:[%s2 + $0x2c] sm:$0xf]
      %v276 = vld [vmem:[%s2 + $0x30] sm:$0xf]
      %v277 = vld [vmem:[%s2 + $0x34] sm:$0xf]
      %v278 = vld [vmem:[%s2 + $0x38] sm:$0xf]
      %v279 = vld [vmem:[%s2 + $0x3c] sm:$0xf]
      %v280 = vld [vmem:[%s3] sm:$0x1]
      %v282 = vlaneseq
      %v283 = vshrl.u32 %v282, 7
      %v284 = vsub.s32 0, %v283
      %v285 = vrot.slane %v280, %v284
      %v303 = vunpack.c.l.b16 %v264
      %v304 = vunpack.c.l.b16 %v265
      %v305 = vunpack.c.l.b16 %v266
      %v306 = vunpack.c.l.b16 %v267
      %v307 = vunpack.c.l.b16 %v268
      %v308 = vunpack.c.l.b16 %v269
      %v309 = vunpack.c.l.b16 %v270
      %v310 = vunpack.c.l.b16 %v271
      %v311 = vunpack.c.l.b16 %v272
      %v312 = vunpack.c.l.b16 %v273
      %v313 = vunpack.c.l.b16 %v274
      %v314 = vunpack.c.l.b16 %v275
      %v315 = vunpack.c.l.b16 %v276
      %v316 = vunpack.c.l.b16 %v277
      %v317 = vunpack.c.l.b16 %v278
      %v318 = vunpack.c.l.b16 %v279
      %v319 = vpack.c.b16 %v304, %v303
      %v320 = vpack.c.b16 %v306, %v305
      %v321 = vpack.c.b16 %v308, %v307
      %v322 = vpack.c.b16 %v310, %v309
      %v323 = vpack.c.b16 %v312, %v311
      %v324 = vpack.c.b16 %v314, %v313
      %v325 = vpack.c.b16 %v316, %v315
      %v326 = vpack.c.b16 %v318, %v317
      %335 = vmatprep.subr.bf16.mxu0 0
      %336 = vmatpush1.bf16.msra.mxu0 %v319
      %337 = vmatprep.subr.bf16.mxu0 0
      %338 = vmatpush1.bf16.msra.mxu0 %v320
      %339 = vmatprep.subr.bf16.mxu0 0
      %340 = vmatpush1.bf16.msra.mxu0 %v321
      %341 = vmatprep.subr.bf16.mxu0 0
      %342 = vmatpush1.bf16.msra.mxu0 %v322
      %343 = vmatprep.subr.bf16.mxu0 0
      %344 = vmatpush1.bf16.msra.mxu0 %v323
      %345 = vmatprep.subr.bf16.mxu0 0
      %346 = vmatpush1.bf16.msra.mxu0 %v324
      %347 = vmatprep.subr.bf16.mxu0 0
      %348 = vmatpush1.bf16.msra.mxu0 %v325
      %349 = vmatprep.subr.bf16.mxu0 0
      %350 = vmatpush1.bf16.msra.mxu0 %v326
      %351 = vmatprep.subr.bf16.mxu0 0
      %352 = vmatpush1.bf16.msra.mxu0 0
      %353 = vmatprep.subr.bf16.mxu0 0
      %354 = vmatpush1.bf16.msra.mxu0 0
      %355 = vmatprep.subr.bf16.mxu0 0
      %356 = vmatpush1.bf16.msra.mxu0 0
      %357 = vmatprep.subr.bf16.mxu0 0
      %358 = vmatpush1.bf16.msra.mxu0 0
      %359 = vmatprep.subr.bf16.mxu0 0
      %360 = vmatpush1.bf16.msra.mxu0 0
      %361 = vmatprep.subr.bf16.mxu0 0
      %362 = vmatpush1.bf16.msra.mxu0 0
      %363 = vmatprep.subr.bf16.mxu0 0
      %364 = vmatpush1.bf16.msra.mxu0 0
      %365 = vmatprep.subr.bf16.mxu0 0
      %366 = vmatpush1.bf16.msra.mxu0 0
      %367 = vmatprep.mubr.bf16.mxu0 0
      %368 = vmatmul.mubr.bf16.gmra.mrb[0].mxu0 %v263
      %v369 = vpop.f32.mrb[0].mxu0
      %v370 = vadd.f32 %v285, %v369
      %v371 = vpop.f32.mrb[0].mxu0
      %v372 = vpop.f32.mrb[0].mxu0
      %v373 = vpop.f32.mrb[0].mxu0
      %374 = vdwg.mxu0
      %v375 = vmax.f32 %v370, 0.0
      %v376 = vld [vmem:[%s4] sm:$0xff]
      %vm377 = vcmask 64512
      %v379 = vsel %vm377, %v376, 0
      %381 = vmatprep.subr.mxu0 0.0
      %382 = vmatpush1.msra.mxu0 %v375
      %383 = vmatprep.subr.mxu0 0.0
      %384 = vmatpush1.msra.mxu0 0.0
      %385 = vmatprep.subr.mxu0 0.0
      %386 = vmatpush1.msra.mxu0 0.0
      %387 = vmatprep.subr.mxu0 0.0
      %388 = vmatpush1.msra.mxu0 0.0
      %389 = vmatprep.subr.mxu0 0.0
      %390 = vmatpush1.msra.mxu0 0.0
      %391 = vmatprep.subr.mxu0 0.0
      %392 = vmatpush1.msra.mxu0 0.0
      %393 = vmatprep.subr.mxu0 0.0
      %394 = vmatpush1.msra.mxu0 0.0
      %395 = vmatprep.subr.mxu0 0.0
      %396 = vmatpush1.msra.mxu0 0.0
      %397 = vmatprep.subr.mxu0 0.0
      %398 = vmatpush1.msra.mxu0 0.0
      %399 = vmatprep.subr.mxu0 0.0
      %400 = vmatpush1.msra.mxu0 0.0
      %401 = vmatprep.subr.mxu0 0.0
      %402 = vmatpush1.msra.mxu0 0.0
      %403 = vmatprep.subr.mxu0 0.0
      %404 = vmatpush1.msra.mxu0 0.0
      %405 = vmatprep.subr.mxu0 0.0
      %406 = vmatpush1.msra.mxu0 0.0
      %407 = vmatprep.subr.mxu0 0.0
      %408 = vmatpush1.msra.mxu0 0.0
      %409 = vmatprep.subr.mxu0 0.0
      %410 = vmatpush1.msra.mxu0 0.0
      %411 = vmatprep.subr.mxu0 0.0
      %412 = vmatpush1.msra.mxu0 0.0
      %413 = vmatprep.subr.mxu0 0.0
      %414 = vmatpush1.msra.mxu0 0.0
      %415 = vmatprep.subr.mxu0 0.0
      %416 = vmatpush1.msra.mxu0 0.0
      %417 = vmatprep.subr.mxu0 0.0
      %418 = vmatpush1.msra.mxu0 0.0
      %419 = vmatprep.subr.mxu0 0.0
      %420 = vmatpush1.msra.mxu0 0.0
      %421 = vmatprep.subr.mxu0 0.0
      %422 = vmatpush1.msra.mxu0 0.0
      %423 = vmatprep.subr.mxu0 0.0
      %424 = vmatpush1.msra.mxu0 0.0
      %425 = vmatprep.subr.mxu0 0.0
      %426 = vmatpush1.msra.mxu0 0.0
      %427 = vmatprep.subr.mxu0 0.0
      %428 = vmatpush1.msra.mxu0 0.0
      %429 = vmatprep.subr.mxu0 0.0
      %430 = vmatpush1.msra.mxu0 0.0
      %431 = vmatprep.subr.mxu0 0.0
      %432 = vmatpush1.msra.mxu0 0.0
      %433 = vmatprep.subr.mxu0 0.0
      %434 = vmatpush1.msra.mxu0 0.0
      %435 = vmatprep.subr.mxu0 0.0
      %436 = vmatpush1.msra.mxu0 0.0
      %437 = vmatprep.subr.mxu0 0.0
      %438 = vmatpush1.msra.mxu0 0.0
      %439 = vmatprep.subr.mxu0 0.0
      %440 = vmatpush1.msra.mxu0 0.0
      %441 = vmatprep.subr.mxu0 0.0
      %442 = vmatpush1.msra.mxu0 0.0
      %443 = vmatprep.subr.mxu0 0.0
      %444 = vmatpush1.msra.mxu0 0.0
      %445 = vmatprep.mubr.f32.mxu0 0.0
      %446 = vmatmul.mubr.f32.gmra.mrb[0].mxu0 %v379
      %v447 = vpop.f32.mrb[0].mxu0
      %v448 = vadd.f32 0.0, %v447
      %v449 = vpop.f32.mrb[0].mxu0
      %450 = vdwg.mxu0
      %v451 = vpack.c.bf16 %v448, %v448
      %v452 = vld [vmem:[%s5] sm:$0xf]
      %v453 = vld [vmem:[%s5 + $0x4] sm:$0xf]
      %v454 = vld [vmem:[%s5 + $0x8] sm:$0xf]
      %v455 = vld [vmem:[%s5 + $0xc] sm:$0xf]
      %v456 = vld [vmem:[%s5 + $0x10] sm:$0xf]
      %v457 = vld [vmem:[%s5 + $0x14] sm:$0xf]
      %v458 = vld [vmem:[%s5 + $0x18] sm:$0xf]
      %v459 = vld [vmem:[%s5 + $0x1c] sm:$0xf]
      %v460 = vld [vmem:[%s5 + $0x20] sm:$0xf]
      %v461 = vld [vmem:[%s5 + $0x24] sm:$0xf]
      %v462 = vld [vmem:[%s5 + $0x28] sm:$0xf]
      %v463 = vld [vmem:[%s5 + $0x2c] sm:$0xf]
      %v464 = vld [vmem:[%s5 + $0x30] sm:$0xf]
      %v465 = vld [vmem:[%s5 + $0x34] sm:$0xf]
      %v466 = vld [vmem:[%s5 + $0x38] sm:$0xf]
      %v467 = vld [vmem:[%s5 + $0x3c] sm:$0xf]
      %v468 = vld [vmem:[%s6] sm:$0x1]
      %v470 = vlaneseq
      %v471 = vshrl.u32 %v470, 7
      %v472 = vsub.s32 0, %v471
      %v473 = vrot.slane %v468, %v472
      %v491 = vunpack.c.l.b16 %v452
      %v492 = vunpack.c.l.b16 %v453
      %v493 = vunpack.c.l.b16 %v454
      %v494 = vunpack.c.l.b16 %v455
      %v495 = vunpack.c.l.b16 %v456
      %v496 = vunpack.c.l.b16 %v457
      %v497 = vunpack.c.l.b16 %v458
      %v498 = vunpack.c.l.b16 %v459
      %v499 = vunpack.c.l.b16 %v460
      %v500 = vunpack.c.l.b16 %v461
      %v501 = vunpack.c.l.b16 %v462
      %v502 = vunpack.c.l.b16 %v463
      %v503 = vunpack.c.l.b16 %v464
      %v504 = vunpack.c.l.b16 %v465
      %v505 = vunpack.c.l.b16 %v466
      %v506 = vunpack.c.l.b16 %v467
      %v507 = vpack.c.b16 %v492, %v491
      %v508 = vpack.c.b16 %v494, %v493
      %v509 = vpack.c.b16 %v496, %v495
      %v510 = vpack.c.b16 %v498, %v497
      %v511 = vpack.c.b16 %v500, %v499
      %v512 = vpack.c.b16 %v502, %v501
      %v513 = vpack.c.b16 %v504, %v503
      %v514 = vpack.c.b16 %v506, %v505
      %523 = vmatprep.subr.bf16.mxu0 0
      %524 = vmatpush1.bf16.msra.mxu0 %v507
      %525 = vmatprep.subr.bf16.mxu0 0
      %526 = vmatpush1.bf16.msra.mxu0 %v508
      %527 = vmatprep.subr.bf16.mxu0 0
      %528 = vmatpush1.bf16.msra.mxu0 %v509
      %529 = vmatprep.subr.bf16.mxu0 0
      %530 = vmatpush1.bf16.msra.mxu0 %v510
      %531 = vmatprep.subr.bf16.mxu0 0
      %532 = vmatpush1.bf16.msra.mxu0 %v511
      %533 = vmatprep.subr.bf16.mxu0 0
      %534 = vmatpush1.bf16.msra.mxu0 %v512
      %535 = vmatprep.subr.bf16.mxu0 0
      %536 = vmatpush1.bf16.msra.mxu0 %v513
      %537 = vmatprep.subr.bf16.mxu0 0
      %538 = vmatpush1.bf16.msra.mxu0 %v514
      %539 = vmatprep.subr.bf16.mxu0 0
      %540 = vmatpush1.bf16.msra.mxu0 0
      %541 = vmatprep.subr.bf16.mxu0 0
      %542 = vmatpush1.bf16.msra.mxu0 0
      %543 = vmatprep.subr.bf16.mxu0 0
      %544 = vmatpush1.bf16.msra.mxu0 0
      %545 = vmatprep.subr.bf16.mxu0 0
      %546 = vmatpush1.bf16.msra.mxu0 0
      %547 = vmatprep.subr.bf16.mxu0 0
      %548 = vmatpush1.bf16.msra.mxu0 0
      %549 = vmatprep.subr.bf16.mxu0 0
      %550 = vmatpush1.bf16.msra.mxu0 0
      %551 = vmatprep.subr.bf16.mxu0 0
      %552 = vmatpush1.bf16.msra.mxu0 0
      %553 = vmatprep.subr.bf16.mxu0 0
      %554 = vmatpush1.bf16.msra.mxu0 0
      %555 = vmatprep.mubr.bf16.mxu0 0
      %556 = vmatmul.mubr.bf16.gmra.mrb[0].mxu0 %v451
      %v557 = vpop.f32.mrb[0].mxu0
      %v558 = vadd.f32 %v473, %v557
      %v559 = vpop.f32.mrb[0].mxu0
      %v560 = vpop.f32.mrb[0].mxu0
      %v561 = vpop.f32.mrb[0].mxu0
      %562 = vdwg.mxu0
      %563 = vst [vmem:[%s260] sm:$0xff] %v558
      %p564 = scmp.lt.s32.totalorder %s24, 3
      %s565 = scalar_select %p564, %s24, 3
      %s566 = smul.addr %s565, 8
      %s567 = scalar_lea.vmem %s7, %s566
      // Predicated region
      $region45: #{pseudo_siamese_det_forward.3} parent=43 // pred_check
        %p568 = pneg %p175
      $region46: #{pseudo_siamese_det_forward.3} parent=43 // pred_check_branch
        %570 = sbr.rel (%p568) target = $region48
      $region47: #{pseudo_siamese_det_forward.3} parent=43 // pred_region
        _
      $region48: #{pseudo_siamese_det_forward.3} parent=43 // pred_fallthru
        _
    $region44: #{pseudo_siamese_det_forward.3} parent=5 // pred_fallthru
      _
    %p571 = scmp.le.s32.totalorder 2, %s19
    // Predicated region
    $region49: #{pseudo_siamese_det_forward.3} parent=5 // pred_check
      %p572 = pneg %p571
    $region50: #{pseudo_siamese_det_forward.3} parent=5 // pred_check_branch
      %574 = sbr.rel (%p572) target = $region52
    $region51: #{pseudo_siamese_det_forward.3} parent=5 // pred_region
      %s575 = ssub.s32 %s19, 2
      // Predicated region
      $region53: #{pseudo_siamese_det_forward.3} parent=51 // pred_check
        %p576 = pneg %p181
      $region54: #{pseudo_siamese_det_forward.3} parent=51 // pred_check_branch
        %578 = sbr.rel (%p576) target = $region56
      $region55: #{pseudo_siamese_det_forward.3} parent=51 // pred_region
        %p579 = scmp.lt.s32.totalorder %s25, 3
        %s580 = scalar_select %p579, %s25, 3
        %s581 = smul.addr %s580, 8
        %s582 = scalar_lea.vmem %s7, %s581
      $region56: #{pseudo_siamese_det_forward.3} parent=51 // pred_fallthru
        _
    $region52: #{pseudo_siamese_det_forward.3} parent=5 // pred_fallthru
      _
  $region6: #{pseudo_siamese_det_forward.3} parent=0 // loop_footer
    %s23 = sadd.s32 1, %s19
  $region7: #{pseudo_siamese_det_forward.3} parent=0 // loop_footer_branch
    %18 = sbr.rel target = $region3
  $region8: #{pseudo_siamese_det_forward.3} parent=0 // loop_exit
    _

</llo_original>
